<compile_context>
chip_gen: v7x
topology: tpu7x:2x2x1
jax: 0.10.0
libtpu: 0.0.40
codegen_flags: <defaults>
</compile_context>

<pallas_src>
import math

import jax
import jax.numpy as jnp
from jax.experimental import pallas as pl
from jax.experimental.pallas import tpu as pltpu

_LANE = 128
_PER_BUF_BYTES = 2 * 1024 * 1024      # target per-block size (>=85% HBM roofline)
_HARD_BLOCK_BYTES = 4 * 1024 * 1024   # cap for full-dim (non-divisible) blocks
_SMALL_ROW_BYTES = 256 * 1024         # below this, fold leading dims into block
_VMEM_LIMIT = 32 * 1024 * 1024        # scoped-VMEM limit, safe on v5e/v6e/v7x


# ---------------------------------------------------------------------------
# Tiling helpers (respect the (8, 128) block constraint, dtype-aware packing).
# ---------------------------------------------------------------------------
def _sublane_multiple(dtype) -> int:
    """Native sublane packing multiple: 8 for 32-bit, 16 for bf16, 32 for 8-bit."""
    return max(8, 32 // jnp.dtype(dtype).itemsize)


def _largest_divisor_tile(dim: int, base: int, max_elems: int):
    """Largest multiple of `base` that divides `dim`, at most ~max_elems.

    Returns None if `dim` is not a multiple of `base` (caller must use the
    full dim or fall back).  Always returns at least `base` when divisible.
    """
    if dim <= 0 or dim % base != 0:
        return None
    cap = min(dim, max(max_elems, base))
    best = base
    k = 1
    while base * k <= cap:
        if dim % (base * k) == 0:
            best = base * k
        k += 1
    return best


def _largest_divisor_leq(m: int, cap: int) -> int:
    """Largest divisor of m that is <= cap (>= 1)."""
    cap = max(1, min(m, cap))
    best = 1
    d = 1
    while d * d <= m:
        if m % d == 0:
            if d <= cap:
                best = max(best, d)
            e = m // d
            if e <= cap:
                best = max(best, e)
        d += 1
    return best


def _pick_lane_tile(d: int, itemsize: int, budget_bytes: int):
    """Lane (last-dim) tile: 128-multiple divisor under budget, or full dim."""
    t = _largest_divisor_tile(d, _LANE, max(budget_bytes // itemsize, _LANE))
    if t is not None:
        return t
    if d * itemsize <= _HARD_BLOCK_BYTES:
        return d                      # full-dim exception of the (8,128) rule
    return None                       # too big and irregular -> caller falls back


def _pick_tile_pair(s: int, d: int, itemsize: int, budget_bytes: int):
    """(ts, td), both 128-multiples dividing s/d, maximizing tile area <= budget."""
    s_cands = [t for t in range(_LANE, s + 1, _LANE) if s % t == 0]
    d_cands = [t for t in range(_LANE, d + 1, _LANE) if d % t == 0]
    best = (s_cands[0], d_cands[0])
    best_key = None
    for ts in s_cands:
        for td in d_cands:
            if ts * td * itemsize <= budget_bytes:
                key = (ts * td, td)   # prefer area, tie-break on lane width
                if best_key is None or key > best_key:
                    best_key, best = key, (ts, td)
    return best


def _params(n_axes: int):
    return pltpu.CompilerParams(
        dimension_semantics=("parallel",) * n_axes,
        vmem_limit_bytes=_VMEM_LIMIT)


def _cost(x):
    return pl.CostEstimate(flops=0, transcendentals=0,
                           bytes_accessed=2 * x.size * x.dtype.itemsize)


# ---------------------------------------------------------------------------
# Kernels
# ---------------------------------------------------------------------------
def _tile_transpose_kernel(x_ref, o_ref):
    # (ts, td) -> (td, ts); lowers to the XLU transpose unit.
    o_ref[...] = x_ref[...].T


def _batched_transpose_kernel(x_ref, o_ref):
    # (bm, S, D) -> (bm, D, S): minor-dims swap with leading batch preserved.
    o_ref[...] = jnp.swapaxes(x_ref[...], -1, -2)


def _copy_kernel(x_ref, o_ref):
    # Pure VMEM copy: the axis permutation lives in the output index_map.
    o_ref[...] = x_ref[...]


# ---------------------------------------------------------------------------
# Path 1: swap of the LAST TWO dims (PatchTST hot path, e.g. Transpose(1,2)
# around BatchNorm1d, or Transpose(-2,-1)).
# ---------------------------------------------------------------------------
def _last2_fold_m(x3, M, S, D, bm):
    # One grid axis over M//bm; each step moves a (bm, S, D) slab (big DMAs).
    return pl.pallas_call(
        _batched_transpose_kernel,
        out_shape=jax.ShapeDtypeStruct((M, D, S), x3.dtype),
        grid=(M // bm,),
        in_specs=[pl.BlockSpec((bm, S, D), lambda m: (m, 0, 0))],
        out_specs=pl.BlockSpec((bm, D, S), lambda m: (m, 0, 0)),
        compiler_params=_params(1),
        cost_estimate=_cost(x3),
    )(x3)


def _last2_tiled(x3, M, S, D, ts, td):
    # Both ts and td appear once as a lane dim (in or out), hence 128-multiples.
    grid = (M, S // ts, D // td)
    return pl.pallas_call(
        _tile_transpose_kernel,
        out_shape=jax.ShapeDtypeStruct((M, D, S), x3.dtype),
        grid=grid,
        in_specs=[pl.BlockSpec((None, ts, td), lambda m, i, j: (m, i, j))],
        out_specs=pl.BlockSpec((None, td, ts), lambda m, i, j: (m, j, i)),
        compiler_params=_params(3),
        cost_estimate=_cost(x3),
    )(x3)


def _transpose_last2(x):
    *lead, S, D = x.shape
    if S == 1 or D == 1:
        # Swapping with a size-1 minor dim is a pure (free) reshape.
        return x.reshape(*lead, D, S)

    M = math.prod(lead) if lead else 1
    itemsize = x.dtype.itemsize
    row_bytes = S * D * itemsize
    x3 = x.reshape(M, S, D)          # free view-fold of untouched leading axes

    if row_bytes <= _SMALL_ROW_BYTES:
        # Small (S, D): fold a chunk of M into the block for large DMAs.
        bm = _largest_divisor_leq(M, max(_PER_BUF_BYTES // row_bytes, 1))
        y3 = _last2_fold_m(x3, M, S, D, bm)
    elif S % _LANE == 0 and D % _LANE == 0:
        ts, td = _pick_tile_pair(S, D, itemsize, _PER_BUF_BYTES)
        y3 = _last2_tiled(x3, M, S, D, ts, td)
    elif row_bytes <= _HARD_BLOCK_BYTES:
        # Irregular mid-size dims: one full (S, D) block per leading index.
        y3 = _last2_fold_m(x3, M, S, D, 1)
    else:
        # TODO(synk): huge non-128-divisible last-two dims would need padded /
        # masked edge tiles; fall back to XLA's transpose to avoid VMEM OOM.
        return jnp.swapaxes(x, -1, -2)
    return y3.reshape(*lead, D, S)


# ---------------------------------------------------------------------------
# Path 2: swap of two dims that both lie BEFORE the last two dims.
# Pure block re-indexing: copy kernel + permuted output index_map.  Only the
# swapped dims (and trailing tile axes) are grid axes; untouched leading dims
# are folded into the block while the VMEM budget allows.
# ---------------------------------------------------------------------------
def _transpose_outer(x, d0, d1):
    shape = x.shape
    n = x.ndim
    itemsize = x.dtype.itemsize
    sub = _sublane_multiple(x.dtype)
    S, D = shape[-2], shape[-1]

    td = _pick_lane_tile(D, itemsize, _PER_BUF_BYTES)
    if td is None:
        # TODO(synk): last dim too large & not 128-divisible -> XLA fallback.
        return jnp.swapaxes(x, d0, d1)
    rem_elems = max(_PER_BUF_BYTES // (td * itemsize), 1)
    ts = _largest_divisor_tile(S, sub, rem_elems)
    if ts is None:
        ts = S                        # full-dim exception
    if ts * td * itemsize > _HARD_BLOCK_BYTES:
        # TODO(synk): irregular, oversized trailing tile -> XLA fallback.
        return jnp.swapaxes(x, d0, d1)

    # Fold untouched leading dims (innermost first) into the block.
    block = [None] * n
    block[n - 2], block[n - 1] = ts, td
    folded = [False] * n
    rem = max(_PER_BUF_BYTES // (ts * td * itemsize), 1)
    for i in range(n - 3, -1, -1):
        if i in (d0, d1):
            continue
        if shape[i] <= rem:
            folded[i] = True
            block[i] = shape[i]
            rem //= max(shape[i], 1)

    lead_grid_dims = [i for i in range(n - 2) if not folded[i]]  # includes d0, d1
    L = len(lead_grid_dims)
    pos = {dim: k for k, dim in enumerate(lead_grid_dims)}
    grid = tuple(shape[i] for i in lead_grid_dims) + (pl.cdiv(S, ts), pl.cdiv(D, td))

    def _make_index_map(swap):
        def index_map(*g):
            idx = [0] * n                       # folded dims -> block index 0
            for i in range(n - 2):
                if i in pos:
                    idx[i] = g[pos[i]]
            idx[n - 2] = g[L]
            idx[n - 1] = g[L + 1]
            if swap:
                idx[d0], idx[d1] = idx[d1], idx[d0]
            return tuple(idx)
        return index_map

    out_shape = list(shape)
    out_shape[d0], out_shape[d1] = out_shape[d1], out_shape[d0]

    return pl.pallas_call(
        _copy_kernel,
        out_shape=jax.ShapeDtypeStruct(tuple(out_shape), x.dtype),
        grid=grid,
        in_specs=[pl.BlockSpec(tuple(block), _make_index_map(False))],
        out_specs=pl.BlockSpec(tuple(block), _make_index_map(True)),
        compiler_params=_params(len(grid)),
        cost_estimate=_cost(x),
    )(x)


# ---------------------------------------------------------------------------
# Public wrapper mirroring the PyTorch module.
# ---------------------------------------------------------------------------
def transpose_pallas(x, dim0, dim1):
    n = x.ndim
    d0 = dim0 % n
    d1 = dim1 % n
    if d0 == d1:
        return x
    d0, d1 = sorted((d0, d1))
    if (d0, d1) == (n - 2, n - 1):
        return _transpose_last2(x)
    if d1 <= n - 3:
        return _transpose_outer(x, d0, d1)
    # TODO(synk): mixed case (exactly one swapped axis inside the last-two
    # lane/sublane tile) needs an in-kernel 3-D tile permute; fall back to
    # XLA's native transpose for that rare pattern.
    return jnp.swapaxes(x, d0, d1)


class Transpose:
    """Pallas-backed equivalent of the PyTorch `Transpose` module."""

    def __init__(self, *dims, contiguous=False):
        assert len(dims) == 2, "Transpose expects exactly two dims"
        self.dims = dims
        # .contiguous() only changes torch strides; values are identical.
        self.contiguous = contiguous

    def __call__(self, x):
        return transpose_pallas(x, *self.dims)

    def __repr__(self):
        d = ", ".join(str(d) for d in self.dims)
        return (f"{self.__class__.__name__}(dims={d}).contiguous()"
                if self.contiguous else f"{self.__class__.__name__}({d})")


if __name__ == "__main__":
    key = jax.random.PRNGKey(0)
    k1, k2, k3, k4, k5 = jax.random.split(key, 5)

    # (a) PatchTST-style 4-D input [batch, n_vars, d_model, patch_num]:
    #     last-two swap -> M-folded batched XLU transpose (one big block).
    x = jax.random.normal(k1, (2, 4, 16, 16), dtype=jnp.float32)
    y = jax.block_until_ready(Transpose(2, 3)(x))
    assert y.shape == (2, 4, 16, 16)
    assert jnp.array_equal(y, jnp.swapaxes(x, 2, 3))

    # same path via negative dims + contiguous flag (value no-op)
    y2 = jax.block_until_ready(Transpose(-1, -2, contiguous=True)(x))
    assert jnp.array_equal(y2, jnp.swapaxes(x, -1, -2))

    # (b) outer-dims swap -> block-permutation copy kernel
    y3 = jax.block_until_ready(Transpose(0, 1)(x))
    assert y3.shape == (4, 2, 16, 16)
    assert jnp.array_equal(y3, jnp.swapaxes(x, 0, 1))

    # (c) 3-D [B, seq, d_model] -> [B, d_model, seq] (around BatchNorm1d):
    #     128-multiple dims -> tiled XLU-transpose path with full 256x384 tiles.
    xb = jax.random.normal(k2, (2, 256, 384), dtype=jnp.float32)
    yb = jax.block_until_ready(Transpose(1, 2)(xb))
    assert jnp.array_equal(yb, jnp.swapaxes(xb, 1, 2))

    # (d) small, non-128 last-two dims -> M-folded batched transpose path
    xc = jax.random.normal(k3, (2, 3, 24, 40), dtype=jnp.float32)
    yc = jax.block_until_ready(Transpose(-2, -1)(xc))
    assert jnp.array_equal(yc, jnp.swapaxes(xc, -2, -1))

    # (e) 5-D outer swap: the untouched middle dim is folded into the block
    xd = jax.random.normal(k4, (2, 3, 4, 8, 128), dtype=jnp.float32)
    yd = jax.block_until_ready(Transpose(0, 1)(xd))
    assert yd.shape == (3, 2, 4, 8, 128)
    assert jnp.array_equal(yd, jnp.swapaxes(xd, 0, 1))

    # (f) bf16 outer swap (dtype-aware sublane tiling: 16-row packing)
    xe = jax.random.normal(k5, (2, 3, 16, 256), dtype=jnp.bfloat16)
    ye = jax.block_until_ready(Transpose(0, 1)(xe))
    assert jnp.array_equal(ye, jnp.swapaxes(xe, 0, 1))

    print("KERNEL_OK")
</pallas_src>

<mosaic_0001>
module attributes {stable_mosaic.version = 11 : i64} {
  func.func @_batched_transpose_kernel(%arg0: i32, %arg1: memref<8x16x16xf32, #tpu.memory_space<vmem>>, %arg2: memref<8x16x16xf32, #tpu.memory_space<vmem>>) attributes {dimension_semantics = [#tpu.dimension_semantics<parallel>], iteration_bounds = array<i64: 1>, scalar_prefetch = 0 : i64, scratch_operands = 0 : i64, tpu.core_type = #tpu.core_type<tc>, window_params = [{transform_indices = @transform_0, window_bounds = array<i64: 8, 16, 16>}, {transform_indices = @transform_1, window_bounds = array<i64: 8, 16, 16>}]} {
    %c0 = arith.constant 0 : index
    %c0_0 = arith.constant 0 : index
    %c0_1 = arith.constant 0 : index
    %0 = vector.load %arg1[%c0, %c0_0, %c0_1] : memref<8x16x16xf32, #tpu.memory_space<vmem>>, vector<8x16x16xf32>
    %1 = tpu.transpose %0, [0, 2, 1] : vector<8x16x16xf32> -> vector<8x16x16xf32>
    %c0_2 = arith.constant 0 : index
    %c0_3 = arith.constant 0 : index
    %c0_4 = arith.constant 0 : index
    %2 = vector.load %arg2[%c0_2, %c0_3, %c0_4] : memref<8x16x16xf32, #tpu.memory_space<vmem>>, vector<8x16x16xf32>
    tpu.vector_store %arg2[%c0_2, %c0_3, %c0_4], %1 {strides = array<i32>} : memref<8x16x16xf32, #tpu.memory_space<vmem>>, vector<8x16x16xf32>,
    return
  }
  func.func @transform_0(%arg0: i32) -> (i32, i32, i32) {
    %c0_i32 = arith.constant 0 : i32
    %c0_i32_0 = arith.constant 0 : i32
    %c0_i32_1 = arith.constant 0 : i32
    return %arg0, %c0_i32, %c0_i32_0 : i32, i32, i32
  }
  func.func @transform_1(%arg0: i32) -> (i32, i32, i32) {
    %c0_i32 = arith.constant 0 : i32
    %c0_i32_0 = arith.constant 0 : i32
    %c0_i32_1 = arith.constant 0 : i32
    return %arg0, %c0_i32, %c0_i32_0 : i32, i32, i32
  }
}

</mosaic_0001>

<llo_original>
// kernel: tpu_custom_call.1
$region0: #{tpu_custom_call.1}
  #allocation0 [shape = 'u32[]', space=smem, size = 0x4, offset = 0x4, fixed_abs, tag = 'smem constant byte address 0x4 - core index']
  #allocation1 [shape = 'u32[144,128]{1,0:T(1,128)}', space=vmem, size = 0x12000, scoped, tag = 'internal scratch']
  %s0 = inlined_call_operand.hbm [shape: f32[8,16,16], index: 0, kind: input, shape index: {}]
  %s1 = inlined_call_operand.hbm [shape: f32[8,16,16], index: 1, kind: output, shape index: {}]
  %s2 = sld [smem:[#allocation0]]
  $region18: #{tpu_custom_call.1} parent=0
    _
  %s4 = ssub.s32 1, %s2
  %s5 = scalar_select 0, %s4, %s2
  $region1: #{tpu_custom_call.1} parent=0
    #allocation2 [shape = 'u8[65536]{0}', space=vmem, size = 0x10000, scoped, tag = 'input window, operand 0, single buffered']
    #allocation3 [shape = 's32[1]{0}', space=sflag, size = 0x4, scoped, tag = 'scoped memory for tpu_custom_call.1']
    #allocation4 [shape = 's32[1]{0}', space=sflag, size = 0x4, scoped, tag = 'scoped memory for tpu_custom_call.1']
    #allocation5 [shape = 'u8[65536]{0}', space=vmem, size = 0x10000, scoped, tag = 'output window, operand 0, single buffered']
    %6 = vsyncpa [#allocation3], 0
    %7 = vsyncpa [#allocation4], 0
    // Predicated region
    $region2: #{tpu_custom_call.1} parent=1 // pred_check
      _
    $region3: #{tpu_custom_call.1} parent=1 // pred_check_branch
      %9 = sbr.rel (0) target = $region5
    $region4: #{tpu_custom_call.1} parent=1 // pred_region
      %s11 = ssub.s32 2048, 2048
      %12 = vsyncadd [#allocation3], %s11
      %s13 = sshll.u32 [#allocation2], 4
      %s14 = int_to_ptr.vmem [resolvable:$true] %s13
      %19 = dma.hbm_to_vmem [thread:$0]  %s0, 2048, %s14, [#allocation3], 128, 128, 8
    $region5: #{tpu_custom_call.1} parent=1 // pred_fallthru
      _
    // Predicated region
    $region6: #{tpu_custom_call.1} parent=1 // pred_check
      _
    $region7: #{tpu_custom_call.1} parent=1 // pred_check_branch
      %21 = sbr.rel (0) target = $region9
    $region8: #{tpu_custom_call.1} parent=1 // pred_region
      %22 = dma.done [#allocation3], 2048
    $region9: #{tpu_custom_call.1} parent=1 // pred_fallthru
      _
    %v23 = vld [vmem:[#allocation2] sm:$0xff]
    %v24 = vld [vmem:[#allocation2 + $0x8] sm:$0xff]
    %v25 = vld [vmem:[#allocation2 + $0x10] sm:$0xff]
    %v26 = vld [vmem:[#allocation2 + $0x18] sm:$0xff]
    %v27 = vld [vmem:[#allocation2 + $0x20] sm:$0xff]
    %v28 = vld [vmem:[#allocation2 + $0x28] sm:$0xff]
    %v29 = vld [vmem:[#allocation2 + $0x30] sm:$0xff]
    %v30 = vld [vmem:[#allocation2 + $0x38] sm:$0xff]
    %v31 = vld [vmem:[#allocation2 + $0x40] sm:$0xff]
    %v32 = vld [vmem:[#allocation2 + $0x48] sm:$0xff]
    %v33 = vld [vmem:[#allocation2 + $0x50] sm:$0xff]
    %v34 = vld [vmem:[#allocation2 + $0x58] sm:$0xff]
    %v35 = vld [vmem:[#allocation2 + $0x60] sm:$0xff]
    %v36 = vld [vmem:[#allocation2 + $0x68] sm:$0xff]
    %v37 = vld [vmem:[#allocation2 + $0x70] sm:$0xff]
    %v38 = vld [vmem:[#allocation2 + $0x78] sm:$0xff]
    %39 = vxpose.xlu0.b32.start [1/16] %v23, 128
    %40 = vxpose.xlu0.b32.cont [2/16] %v24, 128
    %41 = vxpose.xlu0.b32.cont [3/16] 0.0, 128
    %42 = vxpose.xlu0.b32.cont [4/16] 0.0, 128
    %43 = vxpose.xlu0.b32.cont [5/16] 0.0, 128
    %44 = vxpose.xlu0.b32.cont [6/16] 0.0, 128
    %45 = vxpose.xlu0.b32.cont [7/16] 0.0, 128
    %46 = vxpose.xlu0.b32.cont [8/16] 0.0, 128
    %47 = vxpose.xlu0.b32.cont [9/16] 0.0, 128
    %48 = vxpose.xlu0.b32.cont [10/16] 0.0, 128
    %49 = vxpose.xlu0.b32.cont [11/16] 0.0, 128
    %50 = vxpose.xlu0.b32.cont [12/16] 0.0, 128
    %51 = vxpose.xlu0.b32.cont [13/16] 0.0, 128
    %52 = vxpose.xlu0.b32.cont [14/16] 0.0, 128
    %53 = vxpose.xlu0.b32.cont [15/16] 0.0, 128
    %54 = vxpose.xlu0.b32.end [16/16] 0.0, 128
    %v55 = vpop.trf.xlu0
    %v56 = vpop.trf.xlu0
    %v57 = vpop.trf.xlu0
    %v58 = vpop.trf.xlu0
    %v59 = vpop.trf.xlu0
    %v60 = vpop.trf.xlu0
    %v61 = vpop.trf.xlu0
    %v62 = vpop.trf.xlu0
    %v63 = vpop.trf.xlu0
    %v64 = vpop.trf.xlu0
    %v65 = vpop.trf.xlu0
    %v66 = vpop.trf.xlu0
    %v67 = vpop.trf.xlu0
    %v68 = vpop.trf.xlu0
    %v69 = vpop.trf.xlu0
    %v70 = vpop.trf.xlu0
    %71 = vxpose.xlu0.b32.start [1/16] %v25, 128
    %72 = vxpose.xlu0.b32.cont [2/16] %v26, 128
    %73 = vxpose.xlu0.b32.cont [3/16] 0.0, 128
    %74 = vxpose.xlu0.b32.cont [4/16] 0.0, 128
    %75 = vxpose.xlu0.b32.cont [5/16] 0.0, 128
    %76 = vxpose.xlu0.b32.cont [6/16] 0.0, 128
    %77 = vxpose.xlu0.b32.cont [7/16] 0.0, 128
    %78 = vxpose.xlu0.b32.cont [8/16] 0.0, 128
    %79 = vxpose.xlu0.b32.cont [9/16] 0.0, 128
    %80 = vxpose.xlu0.b32.cont [10/16] 0.0, 128
    %81 = vxpose.xlu0.b32.cont [11/16] 0.0, 128
    %82 = vxpose.xlu0.b32.cont [12/16] 0.0, 128
    %83 = vxpose.xlu0.b32.cont [13/16] 0.0, 128
    %84 = vxpose.xlu0.b32.cont [14/16] 0.0, 128
    %85 = vxpose.xlu0.b32.cont [15/16] 0.0, 128
    %86 = vxpose.xlu0.b32.end [16/16] 0.0, 128
    %v87 = vpop.trf.xlu0
    %v88 = vpop.trf.xlu0
    %v89 = vpop.trf.xlu0
    %v90 = vpop.trf.xlu0
    %v91 = vpop.trf.xlu0
    %v92 = vpop.trf.xlu0
    %v93 = vpop.trf.xlu0
    %v94 = vpop.trf.xlu0
    %v95 = vpop.trf.xlu0
    %v96 = vpop.trf.xlu0
    %v97 = vpop.trf.xlu0
    %v98 = vpop.trf.xlu0
    %v99 = vpop.trf.xlu0
    %v100 = vpop.trf.xlu0
    %v101 = vpop.trf.xlu0
    %v102 = vpop.trf.xlu0
    %103 = vxpose.xlu0.b32.start [1/16] %v27, 128
    %104 = vxpose.xlu0.b32.cont [2/16] %v28, 128
    %105 = vxpose.xlu0.b32.cont [3/16] 0.0, 128
    %106 = vxpose.xlu0.b32.cont [4/16] 0.0, 128
    %107 = vxpose.xlu0.b32.cont [5/16] 0.0, 128
    %108 = vxpose.xlu0.b32.cont [6/16] 0.0, 128
    %109 = vxpose.xlu0.b32.cont [7/16] 0.0, 128
    %110 = vxpose.xlu0.b32.cont [8/16] 0.0, 128
    %111 = vxpose.xlu0.b32.cont [9/16] 0.0, 128
    %112 = vxpose.xlu0.b32.cont [10/16] 0.0, 128
    %113 = vxpose.xlu0.b32.cont [11/16] 0.0, 128
    %114 = vxpose.xlu0.b32.cont [12/16] 0.0, 128
    %115 = vxpose.xlu0.b32.cont [13/16] 0.0, 128
    %116 = vxpose.xlu0.b32.cont [14/16] 0.0, 128
    %117 = vxpose.xlu0.b32.cont [15/16] 0.0, 128
    %118 = vxpose.xlu0.b32.end [16/16] 0.0, 128
    %v119 = vpop.trf.xlu0
    %v120 = vpop.trf.xlu0
    %v121 = vpop.trf.xlu0
    %v122 = vpop.trf.xlu0
    %v123 = vpop.trf.xlu0
    %v124 = vpop.trf.xlu0
    %v125 = vpop.trf.xlu0
    %v126 = vpop.trf.xlu0
    %v127 = vpop.trf.xlu0
    %v128 = vpop.trf.xlu0
    %v129 = vpop.trf.xlu0
    %v130 = vpop.trf.xlu0
    %v131 = vpop.trf.xlu0
    %v132 = vpop.trf.xlu0
    %v133 = vpop.trf.xlu0
    %v134 = vpop.trf.xlu0
    %135 = vxpose.xlu0.b32.start [1/16] %v29, 128
    %136 = vxpose.xlu0.b32.cont [2/16] %v30, 128
    %137 = vxpose.xlu0.b32.cont [3/16] 0.0, 128
    %138 = vxpose.xlu0.b32.cont [4/16] 0.0, 128
    %139 = vxpose.xlu0.b32.cont [5/16] 0.0, 128
    %140 = vxpose.xlu0.b32.cont [6/16] 0.0, 128
    %141 = vxpose.xlu0.b32.cont [7/16] 0.0, 128
    %142 = vxpose.xlu0.b32.cont [8/16] 0.0, 128
    %143 = vxpose.xlu0.b32.cont [9/16] 0.0, 128
    %144 = vxpose.xlu0.b32.cont [10/16] 0.0, 128
    %145 = vxpose.xlu0.b32.cont [11/16] 0.0, 128
    %146 = vxpose.xlu0.b32.cont [12/16] 0.0, 128
    %147 = vxpose.xlu0.b32.cont [13/16] 0.0, 128
    %148 = vxpose.xlu0.b32.cont [14/16] 0.0, 128
    %149 = vxpose.xlu0.b32.cont [15/16] 0.0, 128
    %150 = vxpose.xlu0.b32.end [16/16] 0.0, 128
    %v151 = vpop.trf.xlu0
    %v152 = vpop.trf.xlu0
    %v153 = vpop.trf.xlu0
    %v154 = vpop.trf.xlu0
    %v155 = vpop.trf.xlu0
    %v156 = vpop.trf.xlu0
    %v157 = vpop.trf.xlu0
    %v158 = vpop.trf.xlu0
    %v159 = vpop.trf.xlu0
    %v160 = vpop.trf.xlu0
    %v161 = vpop.trf.xlu0
    %v162 = vpop.trf.xlu0
    %v163 = vpop.trf.xlu0
    %v164 = vpop.trf.xlu0
    %v165 = vpop.trf.xlu0
    %v166 = vpop.trf.xlu0
    %167 = vxpose.xlu0.b32.start [1/16] %v31, 128
    %168 = vxpose.xlu0.b32.cont [2/16] %v32, 128
    %169 = vxpose.xlu0.b32.cont [3/16] 0.0, 128
    %170 = vxpose.xlu0.b32.cont [4/16] 0.0, 128
    %171 = vxpose.xlu0.b32.cont [5/16] 0.0, 128
    %172 = vxpose.xlu0.b32.cont [6/16] 0.0, 128
    %173 = vxpose.xlu0.b32.cont [7/16] 0.0, 128
    %174 = vxpose.xlu0.b32.cont [8/16] 0.0, 128
    %175 = vxpose.xlu0.b32.cont [9/16] 0.0, 128
    %176 = vxpose.xlu0.b32.cont [10/16] 0.0, 128
    %177 = vxpose.xlu0.b32.cont [11/16] 0.0, 128
    %178 = vxpose.xlu0.b32.cont [12/16] 0.0, 128
    %179 = vxpose.xlu0.b32.cont [13/16] 0.0, 128
    %180 = vxpose.xlu0.b32.cont [14/16] 0.0, 128
    %181 = vxpose.xlu0.b32.cont [15/16] 0.0, 128
    %182 = vxpose.xlu0.b32.end [16/16] 0.0, 128
    %v183 = vpop.trf.xlu0
    %v184 = vpop.trf.xlu0
    %v185 = vpop.trf.xlu0
    %v186 = vpop.trf.xlu0
    %v187 = vpop.trf.xlu0
    %v188 = vpop.trf.xlu0
    %v189 = vpop.trf.xlu0
    %v190 = vpop.trf.xlu0
    %v191 = vpop.trf.xlu0
    %v192 = vpop.trf.xlu0
    %v193 = vpop.trf.xlu0
    %v194 = vpop.trf.xlu0
    %v195 = vpop.trf.xlu0
    %v196 = vpop.trf.xlu0
    %v197 = vpop.trf.xlu0
    %v198 = vpop.trf.xlu0
    %199 = vxpose.xlu0.b32.start [1/16] %v33, 128
    %200 = vxpose.xlu0.b32.cont [2/16] %v34, 128
    %201 = vxpose.xlu0.b32.cont [3/16] 0.0, 128
    %202 = vxpose.xlu0.b32.cont [4/16] 0.0, 128
    %203 = vxpose.xlu0.b32.cont [5/16] 0.0, 128
    %204 = vxpose.xlu0.b32.cont [6/16] 0.0, 128
    %205 = vxpose.xlu0.b32.cont [7/16] 0.0, 128
    %206 = vxpose.xlu0.b32.cont [8/16] 0.0, 128
    %207 = vxpose.xlu0.b32.cont [9/16] 0.0, 128
    %208 = vxpose.xlu0.b32.cont [10/16] 0.0, 128
    %209 = vxpose.xlu0.b32.cont [11/16] 0.0, 128
    %210 = vxpose.xlu0.b32.cont [12/16] 0.0, 128
    %211 = vxpose.xlu0.b32.cont [13/16] 0.0, 128
    %212 = vxpose.xlu0.b32.cont [14/16] 0.0, 128
    %213 = vxpose.xlu0.b32.cont [15/16] 0.0, 128
    %214 = vxpose.xlu0.b32.end [16/16] 0.0, 128
    %v215 = vpop.trf.xlu0
    %v216 = vpop.trf.xlu0
    %v217 = vpop.trf.xlu0
    %v218 = vpop.trf.xlu0
    %v219 = vpop.trf.xlu0
    %v220 = vpop.trf.xlu0
    %v221 = vpop.trf.xlu0
    %v222 = vpop.trf.xlu0
    %v223 = vpop.trf.xlu0
    %v224 = vpop.trf.xlu0
    %v225 = vpop.trf.xlu0
    %v226 = vpop.trf.xlu0
    %v227 = vpop.trf.xlu0
    %v228 = vpop.trf.xlu0
    %v229 = vpop.trf.xlu0
    %v230 = vpop.trf.xlu0
    %231 = vxpose.xlu0.b32.start [1/16] %v35, 128
    %232 = vxpose.xlu0.b32.cont [2/16] %v36, 128
    %233 = vxpose.xlu0.b32.cont [3/16] 0.0, 128
    %234 = vxpose.xlu0.b32.cont [4/16] 0.0, 128
    %235 = vxpose.xlu0.b32.cont [5/16] 0.0, 128
    %236 = vxpose.xlu0.b32.cont [6/16] 0.0, 128
    %237 = vxpose.xlu0.b32.cont [7/16] 0.0, 128
    %238 = vxpose.xlu0.b32.cont [8/16] 0.0, 128
    %239 = vxpose.xlu0.b32.cont [9/16] 0.0, 128
    %240 = vxpose.xlu0.b32.cont [10/16] 0.0, 128
    %241 = vxpose.xlu0.b32.cont [11/16] 0.0, 128
    %242 = vxpose.xlu0.b32.cont [12/16] 0.0, 128
    %243 = vxpose.xlu0.b32.cont [13/16] 0.0, 128
    %244 = vxpose.xlu0.b32.cont [14/16] 0.0, 128
    %245 = vxpose.xlu0.b32.cont [15/16] 0.0, 128
    %246 = vxpose.xlu0.b32.end [16/16] 0.0, 128
    %v247 = vpop.trf.xlu0
    %v248 = vpop.trf.xlu0
    %v249 = vpop.trf.xlu0
    %v250 = vpop.trf.xlu0
    %v251 = vpop.trf.xlu0
    %v252 = vpop.trf.xlu0
    %v253 = vpop.trf.xlu0
    %v254 = vpop.trf.xlu0
    %v255 = vpop.trf.xlu0
    %v256 = vpop.trf.xlu0
    %v257 = vpop.trf.xlu0
    %v258 = vpop.trf.xlu0
    %v259 = vpop.trf.xlu0
    %v260 = vpop.trf.xlu0
    %v261 = vpop.trf.xlu0
    %v262 = vpop.trf.xlu0
    %263 = vxpose.xlu0.b32.start [1/16] %v37, 128
    %264 = vxpose.xlu0.b32.cont [2/16] %v38, 128
    %265 = vxpose.xlu0.b32.cont [3/16] 0.0, 128
    %266 = vxpose.xlu0.b32.cont [4/16] 0.0, 128
    %267 = vxpose.xlu0.b32.cont [5/16] 0.0, 128
    %268 = vxpose.xlu0.b32.cont [6/16] 0.0, 128
    %269 = vxpose.xlu0.b32.cont [7/16] 0.0, 128
    %270 = vxpose.xlu0.b32.cont [8/16] 0.0, 128
    %271 = vxpose.xlu0.b32.cont [9/16] 0.0, 128
    %272 = vxpose.xlu0.b32.cont [10/16] 0.0, 128
    %273 = vxpose.xlu0.b32.cont [11/16] 0.0, 128
    %274 = vxpose.xlu0.b32.cont [12/16] 0.0, 128
    %275 = vxpose.xlu0.b32.cont [13/16] 0.0, 128
    %276 = vxpose.xlu0.b32.cont [14/16] 0.0, 128
    %277 = vxpose.xlu0.b32.cont [15/16] 0.0, 128
    %278 = vxpose.xlu0.b32.end [16/16] 0.0, 128
    %v279 = vpop.trf.xlu0
    %v280 = vpop.trf.xlu0
    %v281 = vpop.trf.xlu0
    %v282 = vpop.trf.xlu0
    %v283 = vpop.trf.xlu0
    %v284 = vpop.trf.xlu0
    %v285 = vpop.trf.xlu0
    %v286 = vpop.trf.xlu0
    %v287 = vpop.trf.xlu0
    %v288 = vpop.trf.xlu0
    %v289 = vpop.trf.xlu0
    %v290 = vpop.trf.xlu0
    %v291 = vpop.trf.xlu0
    %v292 = vpop.trf.xlu0
    %v293 = vpop.trf.xlu0
    %v294 = vpop.trf.xlu0
    %vm295 = vcmask 130048
    %296 = vst.msk [vmem:[#allocation5] sm:$0xff] %vm295, %v55
    %297 = vst.msk [vmem:[#allocation5 + $0x8] sm:$0xff] %vm295, %v56
    %298 = vst.msk [vmem:[#allocation5 + $0x10] sm:$0xff] %vm295, %v87
    %299 = vst.msk [vmem:[#allocation5 + $0x18] sm:$0xff] %vm295, %v88
    %300 = vst.msk [vmem:[#allocation5 + $0x20] sm:$0xff] %vm295, %v119
    %301 = vst.msk [vmem:[#allocation5 + $0x28] sm:$0xff] %vm295, %v120
    %302 = vst.msk [vmem:[#allocation5 + $0x30] sm:$0xff] %vm295, %v151
    %303 = vst.msk [vmem:[#allocation5 + $0x38] sm:$0xff] %vm295, %v152
    %304 = vst.msk [vmem:[#allocation5 + $0x40] sm:$0xff] %vm295, %v183
    %305 = vst.msk [vmem:[#allocation5 + $0x48] sm:$0xff] %vm295, %v184
    %306 = vst.msk [vmem:[#allocation5 + $0x50] sm:$0xff] %vm295, %v215
    %307 = vst.msk [vmem:[#allocation5 + $0x58] sm:$0xff] %vm295, %v216
    %308 = vst.msk [vmem:[#allocation5 + $0x60] sm:$0xff] %vm295, %v247
    %309 = vst.msk [vmem:[#allocation5 + $0x68] sm:$0xff] %vm295, %v248
    %310 = vst.msk [vmem:[#allocation5 + $0x70] sm:$0xff] %vm295, %v279
    %311 = vst.msk [vmem:[#allocation5 + $0x78] sm:$0xff] %vm295, %v280
    // Predicated region
    $region10: #{tpu_custom_call.1} parent=1 // pred_check
      _
    $region11: #{tpu_custom_call.1} parent=1 // pred_check_branch
      %313 = sbr.rel (0) target = $region13
    $region12: #{tpu_custom_call.1} parent=1 // pred_region
      %s315 = ssub.s32 2048, 2048
      %316 = vsyncadd [#allocation4], %s315
      %s317 = sshll.u32 [#allocation5], 4
      %s318 = int_to_ptr.vmem [resolvable:$true] %s317
      %323 = dma.vmem_to_hbm [thread:$0]  %s318, 2048, %s1, [#allocation4], 128, 128, 8
    $region13: #{tpu_custom_call.1} parent=1 // pred_fallthru
      _
    // Predicated region
    $region14: #{tpu_custom_call.1} parent=1 // pred_check
      _
    $region15: #{tpu_custom_call.1} parent=1 // pred_check_branch
      %325 = sbr.rel (0) target = $region17
    $region16: #{tpu_custom_call.1} parent=1 // pred_region
      %326 = dma.done [#allocation4], 2048
    $region17: #{tpu_custom_call.1} parent=1 // pred_fallthru
      _
    %327 = vsyncpa [#allocation3], 1
    %328 = vsyncpa [#allocation4], 1

</llo_original>
